<compile_context>
chip_gen: v5e
topology: v5e:2x2
jax: 0.10.0
libtpu: 0.0.40
codegen_flags: <defaults>
</compile_context>

<pallas_src>
import jax
import jax.numpy as jnp
from jax.experimental import pallas as pl
from jax.experimental.pallas import tpu as pltpu

_LANES = 128


def _james_kernel(x_ref, out1_ref, out2_ref):
    x = x_ref[...]
    o1 = x + jnp.asarray(100, dtype=x.dtype)
    out1_ref[...] = o1
    out2_ref[...] = o1 * o1


def _tuning():
    """Generation-aware row-tile sizes for the (rows, 128) f32 slab."""
    kind = ""
    try:
        kind = jax.devices()[0].device_kind.lower()
    except Exception:
        pass
    if "v5 lite" in kind or "v5e" in kind or "v5litepod" in kind:
        # v5e: 16 MiB scoped-VMEM default -> 2 MiB/array tiles
        # (3 arrays x 2 buffers x 2 MiB = 12 MiB).
        return dict(max_row_tile=4096, single_block_rows=4096, min_blocks=1)
    if "v7" in kind:
        # v7x: 2 TensorCores, 64 MiB physical / 32 MiB scoped VMEM.
        # 4 MiB/array tiles (24 MiB double-buffered); past ~1 MiB prefer
        # >=2 parallel blocks so both cores stream half the rows each.
        return dict(max_row_tile=8192, single_block_rows=2048, min_blocks=2)
    # v6e (and default): 32 MiB scoped default -> 4 MiB/array tiles.
    return dict(max_row_tile=8192, single_block_rows=8192, min_blocks=1)


@jax.jit
def james_forward(x):
    """Returns (x + 100, (x + 100)**2), matching James.forward."""
    orig_shape = x.shape
    dtype = x.dtype
    total = x.size
    itemsize = jnp.dtype(dtype).itemsize
    tune = _tuning()

    # ---- layout: lane-dense (rows, 128) slab -------------------------------
    rows = -(-total // _LANES)  # cdiv
    padded_total = rows * _LANES
    if padded_total == total:
        # Common case (and the case for (2,4,16,16)): pure reshape, no copy.
        x2d = jnp.reshape(x, (rows, _LANES))
    else:
        # Rare: element count not a multiple of 128; pad the flat tail only.
        x_flat = jnp.pad(jnp.reshape(x, (-1,)), (0, padded_total - total))
        x2d = jnp.reshape(x_flat, (rows, _LANES))

    # ---- tile selection (no row padding; cdiv grid masks the tail block) ---
    if rows <= tune["single_block_rows"]:
        # One block covering the whole slab: block_shape == array shape, so
        # the (8,128) divisibility rule does not apply. Single grid step.
        row_tile = rows
        grid = (1,)
    else:
        # At least `min_blocks` blocks (keeps both v7x cores busy); row tile
        # rounded up to a multiple of 8 to satisfy the (8,128) constraint.
        target = -(-rows // tune["min_blocks"])
        target = -(-target // 8) * 8
        row_tile = min(tune["max_row_tile"], target)
        grid = (pl.cdiv(rows, row_tile),)

    spec = pl.BlockSpec((row_tile, _LANES), lambda i: (i, 0))

    cost = pl.CostEstimate(
        flops=2 * padded_total,                       # one add + one mul / elem
        transcendentals=0,
        bytes_accessed=3 * padded_total * itemsize,   # 1 read + 2 writes
    )

    out1, out2 = pl.pallas_call(
        _james_kernel,
        out_shape=(
            jax.ShapeDtypeStruct((rows, _LANES), dtype),
            jax.ShapeDtypeStruct((rows, _LANES), dtype),
        ),
        grid=grid,
        in_specs=[spec],
        out_specs=(spec, spec),
        compiler_params=pltpu.CompilerParams(
            dimension_semantics=("parallel",),
        ),
        cost_estimate=cost,
    )(x2d)

    # ---- back to the original NCHW shape -----------------------------------
    if padded_total == total:
        return jnp.reshape(out1, orig_shape), jnp.reshape(out2, orig_shape)

    def _unflatten(y):
        y = jnp.reshape(y, (-1,))[:total]
        return jnp.reshape(y, orig_shape)

    return _unflatten(out1), _unflatten(out2)


if __name__ == "__main__":
    key = jax.random.PRNGKey(0)
    x = jax.random.normal(key, (2, 4, 16, 16), dtype=jnp.float32)

    out1, out2 = james_forward(x)
    jax.block_until_ready((out1, out2))

    # Reference check against plain JAX.
    ref1 = x + 100.0
    ref2 = ref1 * ref1
    assert out1.shape == x.shape and out2.shape == x.shape
    assert jnp.allclose(out1, ref1, atol=1e-6, rtol=1e-6)
    assert jnp.allclose(out2, ref2, atol=1e-4, rtol=1e-6)

    print("KERNEL_OK")
</pallas_src>

<mosaic_0001>
module attributes {stable_mosaic.version = 11 : i64} {
  func.func @_james_kernel(%arg0: i32, %arg1: memref<16x128xf32, #tpu.memory_space<vmem>>, %arg2: memref<16x128xf32, #tpu.memory_space<vmem>>, %arg3: memref<16x128xf32, #tpu.memory_space<vmem>>) attributes {dimension_semantics = [#tpu.dimension_semantics<parallel>], iteration_bounds = array<i64: 1>, scalar_prefetch = 0 : i64, scratch_operands = 0 : i64, tpu.core_type = #tpu.core_type<tc>, window_params = [{transform_indices = @transform_0, window_bounds = array<i64: 16, 128>}, {transform_indices = @transform_1, window_bounds = array<i64: 16, 128>}, {transform_indices = @transform_2, window_bounds = array<i64: 16, 128>}]} {
    %c0 = arith.constant 0 : index
    %c0_0 = arith.constant 0 : index
    %0 = vector.load %arg1[%c0, %c0_0] : memref<16x128xf32, #tpu.memory_space<vmem>>, vector<16x128xf32>
    %cst = arith.constant 1.000000e+02 : f32
    %1 = vector.broadcast %cst : f32 to vector<16x128xf32>
    %2 = arith.addf %0, %1 : vector<16x128xf32>
    %c0_1 = arith.constant 0 : index
    %c0_2 = arith.constant 0 : index
    %3 = vector.load %arg2[%c0_1, %c0_2] : memref<16x128xf32, #tpu.memory_space<vmem>>, vector<16x128xf32>
    tpu.vector_store %arg2[%c0_1, %c0_2], %2 {strides = array<i32>} : memref<16x128xf32, #tpu.memory_space<vmem>>, vector<16x128xf32>,
    %4 = arith.mulf %2, %2 : vector<16x128xf32>
    %c0_3 = arith.constant 0 : index
    %c0_4 = arith.constant 0 : index
    %5 = vector.load %arg3[%c0_3, %c0_4] : memref<16x128xf32, #tpu.memory_space<vmem>>, vector<16x128xf32>
    tpu.vector_store %arg3[%c0_3, %c0_4], %4 {strides = array<i32>} : memref<16x128xf32, #tpu.memory_space<vmem>>, vector<16x128xf32>,
    return
  }
  func.func @transform_0(%arg0: i32) -> (i32, i32) {
    %c0_i32 = arith.constant 0 : i32
    %c0_i32_0 = arith.constant 0 : i32
    return %arg0, %c0_i32 : i32, i32
  }
  func.func @transform_1(%arg0: i32) -> (i32, i32) {
    %c0_i32 = arith.constant 0 : i32
    %c0_i32_0 = arith.constant 0 : i32
    return %arg0, %c0_i32 : i32, i32
  }
  func.func @transform_2(%arg0: i32) -> (i32, i32) {
    %c0_i32 = arith.constant 0 : i32
    %c0_i32_0 = arith.constant 0 : i32
    return %arg0, %c0_i32 : i32, i32
  }
}

</mosaic_0001>

<llo_original>
// kernel: james_forward.1
$region0: #{james_forward.1}
  #allocation0 [shape = 'u32[]', space=smem, size = 0x4, offset = 0x4, fixed_abs, tag = 'smem constant byte address 0x4 - core index']
  #allocation1 [shape = 'u32[72,128]{1,0:T(1,128)}', space=vmem, size = 0x9000, scoped, tag = 'internal scratch']
  %s0 = inlined_call_operand.vmem [shape: f32[16,128], index: 0, kind: input, shape index: {}]
  %s1 = inlined_call_operand.vmem [shape: f32[16,128], index: 1, kind: output, shape index: {0}]
  %s2 = inlined_call_operand.vmem [shape: f32[16,128], index: 2, kind: output, shape index: {1}]
  %3 = xla_tuple %s1, %s2
  %s4 = sld [smem:[#allocation0]]
  $region22: #{james_forward.1} parent=0
    _
  %s6 = ssub.s32 1, %s4
  %s7 = scalar_select 0, %s6, %s4
  // Predicated region
  $region2: #{james_forward.1} parent=0 // pred_check
    _
  $region3: #{james_forward.1} parent=0 // pred_check_branch
    %9 = sbr.rel (0) target = $region5
  $region4: #{james_forward.1} parent=0 // pred_region
    _
  $region5: #{james_forward.1} parent=0 // pred_fallthru
    _
  %v10 = vld [vmem:[%s0] sm:$0xff]
  %v11 = vld [vmem:[%s0 + $0x8] sm:$0xff]
  %v12 = vadd.f32 %v10, 100.0
  %v13 = vadd.f32 %v11, 100.0
  %14 = vst [vmem:[%s1] sm:$0xff] %v12
  %15 = vst [vmem:[%s1 + $0x8] sm:$0xff] %v13
  %v16 = vmul.f32 %v12, %v12
  %v17 = vmul.f32 %v13, %v13
  %18 = vst [vmem:[%s2] sm:$0xff] %v16
  %19 = vst [vmem:[%s2 + $0x8] sm:$0xff] %v17
  // Predicated region
  $region6: #{james_forward.1} parent=0 // pred_check
    _
  $region7: #{james_forward.1} parent=0 // pred_check_branch
    %21 = sbr.rel (0) target = $region9
  $region8: #{james_forward.1} parent=0 // pred_region
    _
  $region9: #{james_forward.1} parent=0 // pred_fallthru
    _
  // Predicated region
  $region10: #{james_forward.1} parent=0 // pred_check
    _
  $region11: #{james_forward.1} parent=0 // pred_check_branch
    %23 = sbr.rel (0) target = $region13
  $region12: #{james_forward.1} parent=0 // pred_region
    _
  $region13: #{james_forward.1} parent=0 // pred_fallthru
    _
  // Predicated region
  $region14: #{james_forward.1} parent=0 // pred_check
    _
  $region15: #{james_forward.1} parent=0 // pred_check_branch
    %25 = sbr.rel (0) target = $region17
  $region16: #{james_forward.1} parent=0 // pred_region
    _
  $region17: #{james_forward.1} parent=0 // pred_fallthru
    _
  // Predicated region
  $region18: #{james_forward.1} parent=0 // pred_check
    _
  $region19: #{james_forward.1} parent=0 // pred_check_branch
    %27 = sbr.rel (0) target = $region21
  $region20: #{james_forward.1} parent=0 // pred_region
    _
  $region21: #{james_forward.1} parent=0 // pred_fallthru
    _

</llo_original>
